<compile_context>
chip_gen: v7x
topology: tpu7x:2x2x1
jax: 0.10.0
libtpu: 0.0.40
codegen_flags: <defaults>
</compile_context>

<pallas_src>
import functools

import jax
import jax.numpy as jnp
from jax.experimental import pallas as pl
from jax.experimental.pallas import tpu as pltpu


# --------------------------------------------------------------------------- #
# Kernel
# --------------------------------------------------------------------------- #
def datanet_kernel(alpha_ref,
                   fx_re_ref, fx_im_ref,
                   fbfy_re_ref, fbfy_im_ref,
                   fb_re_ref, fb_im_ref,
                   *rest, derive):
    if derive:
        out_re_ref, out_im_ref = rest
    else:
        (fbc_re_ref, fbc_im_ref, f2b_re_ref, f2b_im_ref,
         out_re_ref, out_im_ref) = rest

    G = fb_re_ref.shape[0]                 # sf * sf (static)
    inv_g = 1.0 / float(G)

    alpha = alpha_ref[...]                 # (1, TB, 1) -> broadcasts over (G, TB, TM)

    fb_re = fb_re_ref[...]
    fb_im = fb_im_ref[...]

    # FR = FBFy + FFT(alpha * x) == FBFy + alpha * FFT(x)   (FFT linearity)
    fr_re = fbfy_re_ref[...] + alpha * fx_re_ref[...]
    fr_im = fbfy_im_ref[...] + alpha * fx_im_ref[...]

    # x1 = cmul(FB, FR)
    x1_re = fb_re * fr_re - fb_im * fr_im
    x1_im = fb_re * fr_im + fb_im * fr_re

    # FBR = mean over the sf*sf sub-blocks == mean over leading axis G
    fbr_re = jnp.sum(x1_re, axis=0, keepdims=True) * inv_g
    fbr_im = jnp.sum(x1_im, axis=0, keepdims=True) * inv_g

    if derive:
        # F2B = |FB|^2 has zero imaginary part -> complex divide becomes real.
        f2b_re = fb_re * fb_re + fb_im * fb_im
        invw_re = jnp.sum(f2b_re, axis=0, keepdims=True) * inv_g
        inv_den = 1.0 / (invw_re + alpha)
        invwbr_re = fbr_re * inv_den
        invwbr_im = fbr_im * inv_den
        fbc_re = fb_re                      # FBC = conj(FB)
        fbc_im = -fb_im
    else:
        invw_re = jnp.sum(f2b_re_ref[...], axis=0, keepdims=True) * inv_g
        invw_im = jnp.sum(f2b_im_ref[...], axis=0, keepdims=True) * inv_g
        den_re = invw_re + alpha            # csum(invW, alpha)
        den_im = invw_im
        inv_d2 = 1.0 / (den_re * den_re + den_im * den_im)
        invwbr_re = (fbr_re * den_re + fbr_im * den_im) * inv_d2
        invwbr_im = (fbr_im * den_re - fbr_re * den_im) * inv_d2
        fbc_re = fbc_re_ref[...]
        fbc_im = fbc_im_ref[...]

    # invWBR.repeat(1,1,sf,sf) == broadcast over the leading sub-block axis.
    # FCBinvWBR = cmul(FBC, tiled invWBR)
    fcb_re = fbc_re * invwbr_re - fbc_im * invwbr_im
    fcb_im = fbc_re * invwbr_im + fbc_im * invwbr_re

    inv_alpha = 1.0 / alpha
    out_re_ref[...] = (fr_re - fcb_re) * inv_alpha
    out_im_ref[...] = (fr_im - fcb_im) * inv_alpha


# --------------------------------------------------------------------------- #
# Block-size selection
# --------------------------------------------------------------------------- #
def _divisors(n):
    ds = set()
    i = 1
    while i * i <= n:
        if n % i == 0:
            ds.add(i)
            ds.add(n // i)
        i += 1
    return ds


def _pick_blocks(B, M, G, n_planes, budget_bytes):
    """Largest (TB, TM) under the VMEM budget, respecting the (8,128) rule on
    the last two block dims (multiple of 8 / 128, or equal to the full dim)."""
    tb_cands = sorted(d for d in _divisors(B) if d % 8 == 0 or d == B)
    tm_cands = sorted(d for d in _divisors(M) if d % 128 == 0 or d == M)
    # per-element cost: double-buffered in/out streams + ~6 in-kernel temporaries
    cost_per_elt = (2 * n_planes + 6) * 4
    best = (tb_cands[0], tm_cands[0])          # smallest valid fallback
    best_elems = 0
    for tb in tb_cands:
        for tm in tm_cands:
            if G * tb * tm * cost_per_elt <= budget_bytes and tb * tm > best_elems:
                best, best_elems = (tb, tm), tb * tm
    return best


# --------------------------------------------------------------------------- #
# Wrapper
# --------------------------------------------------------------------------- #
def datanet_forward(x, FB, FBC, F2B, FBFy, alpha, sf, *,
                    derive_fbc_f2b=True,
                    vmem_budget_bytes=20 * 1024 * 1024):
    """Pallas implementation of DataNet.forward. Returns Xest (N,C,H,W) float32."""
    N, C, H, W = x.shape
    if H % sf or W % sf:
        raise ValueError("H and W must be divisible by sf")
    B = N * C
    G = sf * sf
    Hs, Ws = H // sf, W // sf
    M = Hs * Ws

    def to_blocks(p):                       # (N,C,H,W) real -> (G, B, M) f32
        p = p.reshape(B, sf, Hs, sf, Ws)
        p = jnp.transpose(p, (1, 3, 0, 2, 4))       # (sf, sf, B, Hs, Ws)
        return p.reshape(G, B, M).astype(jnp.float32)

    def from_blocks(p):                     # (G, B, M) -> (N,C,H,W)
        p = p.reshape(sf, sf, B, Hs, Ws)
        p = jnp.transpose(p, (2, 0, 3, 1, 4))       # (B, sf, Hs, sf, Ws)
        return p.reshape(N, C, H, W)

    # TODO(synk): FFT/IFFT have no Pallas TPU lowering; use jnp.fft outside.
    Fx = jnp.fft.fft2(x.astype(jnp.float32))

    alpha_b = jnp.broadcast_to(alpha.reshape(N, 1).astype(jnp.float32),
                               (N, C)).reshape(1, B, 1)

    inputs = [alpha_b,
              to_blocks(jnp.real(Fx)), to_blocks(jnp.imag(Fx)),
              to_blocks(FBFy[..., 0]), to_blocks(FBFy[..., 1]),
              to_blocks(FB[..., 0]), to_blocks(FB[..., 1])]
    if not derive_fbc_f2b:
        inputs += [to_blocks(FBC[..., 0]), to_blocks(FBC[..., 1]),
                   to_blocks(F2B[..., 0]), to_blocks(F2B[..., 1])]
    n_planes = (len(inputs) - 1) + 2        # streamed planes: inputs + 2 outputs

    TB, TM = _pick_blocks(B, M, G, n_planes, vmem_budget_bytes)
    grid = (B // TB, M // TM)

    plane_spec = pl.BlockSpec((G, TB, TM), lambda b, m: (0, b, m))
    alpha_spec = pl.BlockSpec((1, TB, 1), lambda b, m: (0, b, 0))

    kernel = functools.partial(datanet_kernel, derive=derive_fbc_f2b)
    out_re, out_im = pl.pallas_call(
        kernel,
        out_shape=[jax.ShapeDtypeStruct((G, B, M), jnp.float32),
                   jax.ShapeDtypeStruct((G, B, M), jnp.float32)],
        grid=grid,
        in_specs=[alpha_spec] + [plane_spec] * (len(inputs) - 1),
        out_specs=[plane_spec, plane_spec],
        compiler_params=pltpu.CompilerParams(
            dimension_semantics=("parallel", "parallel"),
            vmem_limit_bytes=48 * 1024 * 1024),
    )(*inputs)

    FX = from_blocks(out_re) + 1j * from_blocks(out_im)
    Xest = jnp.real(jnp.fft.ifft2(FX)).astype(jnp.float32)
    return Xest


# --------------------------------------------------------------------------- #
# Pure-JAX reference (mirrors the PyTorch forward) for verification
# --------------------------------------------------------------------------- #
def datanet_reference(x, FB, FBC, F2B, FBFy, alpha, sf):
    def to_c(t):
        return t[..., 0] + 1j * t[..., 1]

    N, C, H, W = x.shape
    Hs, Ws = H // sf, W // sf
    al = alpha.reshape(N, 1, 1, 1).astype(jnp.float32)

    FR = to_c(FBFy) + jnp.fft.fft2(al * x)
    x1 = to_c(FB) * FR

    def splits_mean(a):
        a = a.reshape(N, C, sf, Hs, sf, Ws)
        return a.mean(axis=(2, 4))

    FBR = splits_mean(x1)
    invW = splits_mean(to_c(F2B))
    invWBR = FBR / (invW + al)
    FCBinvWBR = to_c(FBC) * jnp.tile(invWBR, (1, 1, sf, sf))
    FX = (FR - FCBinvWBR) / al
    return jnp.real(jnp.fft.ifft2(FX)).astype(jnp.float32)


if __name__ == "__main__":
    N, C, H, W = 2, 4, 16, 16
    sf = 2

    key = jax.random.PRNGKey(0)
    k = jax.random.split(key, 6)

    x = jax.random.normal(k[0], (N, C, H, W), dtype=jnp.float32)

    fb_re = jax.random.normal(k[1], (N, C, H, W), dtype=jnp.float32)
    fb_im = jax.random.normal(k[2], (N, C, H, W), dtype=jnp.float32)
    FB = jnp.stack([fb_re, fb_im], axis=-1)                   # FFT of blur kernel
    FBC = jnp.stack([fb_re, -fb_im], axis=-1)                 # conjugate
    F2B = jnp.stack([fb_re ** 2 + fb_im ** 2,
                     jnp.zeros_like(fb_re)], axis=-1)         # |FB|^2 (imag = 0)
    FBFy = jax.random.normal(k[3], (N, C, H, W, 2), dtype=jnp.float32)
    alpha = jax.random.uniform(k[4], (N, 1, 1, 1), dtype=jnp.float32,
                               minval=0.2, maxval=1.0)

    ref = jax.block_until_ready(datanet_reference(x, FB, FBC, F2B, FBFy, alpha, sf))

    # Optimized path: FBC / F2B derived in-kernel from FB (USRNet construction).
    out_fast = jax.block_until_ready(
        datanet_forward(x, FB, FBC, F2B, FBFy, alpha, sf, derive_fbc_f2b=True))
    # Fully general path: FBC / F2B streamed as given.
    out_gen = jax.block_until_ready(
        datanet_forward(x, FB, FBC, F2B, FBFy, alpha, sf, derive_fbc_f2b=False))

    assert out_fast.shape == (N, C, H, W), out_fast.shape
    assert bool(jnp.allclose(out_fast, ref, rtol=1e-4, atol=1e-4)), (
        float(jnp.max(jnp.abs(out_fast - ref))))
    assert bool(jnp.allclose(out_gen, ref, rtol=1e-4, atol=1e-4)), (
        float(jnp.max(jnp.abs(out_gen - ref))))

    print("KERNEL_OK")
</pallas_src>

<mosaic_0001>
module attributes {stable_mosaic.version = 11 : i64} {
  func.func @datanet_kernel(%arg0: i32, %arg1: i32, %arg2: memref<1x8x1xf32, #tpu.memory_space<vmem>>, %arg3: memref<4x8x64xf32, #tpu.memory_space<vmem>>, %arg4: memref<4x8x64xf32, #tpu.memory_space<vmem>>, %arg5: memref<4x8x64xf32, #tpu.memory_space<vmem>>, %arg6: memref<4x8x64xf32, #tpu.memory_space<vmem>>, %arg7: memref<4x8x64xf32, #tpu.memory_space<vmem>>, %arg8: memref<4x8x64xf32, #tpu.memory_space<vmem>>, %arg9: memref<4x8x64xf32, #tpu.memory_space<vmem>>, %arg10: memref<4x8x64xf32, #tpu.memory_space<vmem>>) attributes {dimension_semantics = [#tpu.dimension_semantics<parallel>, #tpu.dimension_semantics<parallel>], iteration_bounds = array<i64: 1, 1>, scalar_prefetch = 0 : i64, scratch_operands = 0 : i64, tpu.core_type = #tpu.core_type<tc>, window_params = [{transform_indices = @transform_0, window_bounds = array<i64: 1, 8, 1>}, {transform_indices = @transform_1, window_bounds = array<i64: 4, 8, 64>}, {transform_indices = @transform_2, window_bounds = array<i64: 4, 8, 64>}, {transform_indices = @transform_3, window_bounds = array<i64: 4, 8, 64>}, {transform_indices = @transform_4, window_bounds = array<i64: 4, 8, 64>}, {transform_indices = @transform_5, window_bounds = array<i64: 4, 8, 64>}, {transform_indices = @transform_6, window_bounds = array<i64: 4, 8, 64>}, {transform_indices = @transform_7, window_bounds = array<i64: 4, 8, 64>}, {transform_indices = @transform_8, window_bounds = array<i64: 4, 8, 64>}]} {
    %c0 = arith.constant 0 : index
    %c0_0 = arith.constant 0 : index
    %c0_1 = arith.constant 0 : index
    %0 = vector.load %arg2[%c0, %c0_0, %c0_1] : memref<1x8x1xf32, #tpu.memory_space<vmem>>, vector<1x8x1xf32>
    %c0_2 = arith.constant 0 : index
    %c0_3 = arith.constant 0 : index
    %c0_4 = arith.constant 0 : index
    %1 = vector.load %arg7[%c0_2, %c0_3, %c0_4] : memref<4x8x64xf32, #tpu.memory_space<vmem>>, vector<4x8x64xf32>
    %c0_5 = arith.constant 0 : index
    %c0_6 = arith.constant 0 : index
    %c0_7 = arith.constant 0 : index
    %2 = vector.load %arg8[%c0_5, %c0_6, %c0_7] : memref<4x8x64xf32, #tpu.memory_space<vmem>>, vector<4x8x64xf32>
    %c0_8 = arith.constant 0 : index
    %c0_9 = arith.constant 0 : index
    %c0_10 = arith.constant 0 : index
    %3 = vector.load %arg5[%c0_8, %c0_9, %c0_10] : memref<4x8x64xf32, #tpu.memory_space<vmem>>, vector<4x8x64xf32>
    %c0_11 = arith.constant 0 : index
    %c0_12 = arith.constant 0 : index
    %c0_13 = arith.constant 0 : index
    %4 = vector.load %arg3[%c0_11, %c0_12, %c0_13] : memref<4x8x64xf32, #tpu.memory_space<vmem>>, vector<4x8x64xf32>
    %5 = vector.broadcast %0 : vector<1x8x1xf32> to vector<4x8x64xf32>
    %6 = arith.mulf %5, %4 : vector<4x8x64xf32>
    %7 = arith.addf %3, %6 : vector<4x8x64xf32>
    %c0_14 = arith.constant 0 : index
    %c0_15 = arith.constant 0 : index
    %c0_16 = arith.constant 0 : index
    %8 = vector.load %arg6[%c0_14, %c0_15, %c0_16] : memref<4x8x64xf32, #tpu.memory_space<vmem>>, vector<4x8x64xf32>
    %c0_17 = arith.constant 0 : index
    %c0_18 = arith.constant 0 : index
    %c0_19 = arith.constant 0 : index
    %9 = vector.load %arg4[%c0_17, %c0_18, %c0_19] : memref<4x8x64xf32, #tpu.memory_space<vmem>>, vector<4x8x64xf32>
    %10 = vector.broadcast %0 : vector<1x8x1xf32> to vector<4x8x64xf32>
    %11 = arith.mulf %10, %9 : vector<4x8x64xf32>
    %12 = arith.addf %8, %11 : vector<4x8x64xf32>
    %13 = arith.mulf %1, %7 : vector<4x8x64xf32>
    %14 = arith.mulf %2, %12 : vector<4x8x64xf32>
    %15 = arith.subf %13, %14 : vector<4x8x64xf32>
    %16 = arith.mulf %1, %12 : vector<4x8x64xf32>
    %17 = arith.mulf %2, %7 : vector<4x8x64xf32>
    %18 = arith.addf %16, %17 : vector<4x8x64xf32>
    %cst = arith.constant dense<0.000000e+00> : vector<8x64xf32>
    %19 = vector.multi_reduction <add>, %15, %cst [0] : vector<4x8x64xf32> to vector<8x64xf32>
    %20 = vector.shape_cast %19 : vector<8x64xf32> to vector<1x8x64xf32>
    %cst_20 = arith.constant 2.500000e-01 : f32
    %21 = vector.broadcast %cst_20 : f32 to vector<1x8x64xf32>
    %22 = arith.mulf %20, %21 : vector<1x8x64xf32>
    %cst_21 = arith.constant dense<0.000000e+00> : vector<8x64xf32>
    %23 = vector.multi_reduction <add>, %18, %cst_21 [0] : vector<4x8x64xf32> to vector<8x64xf32>
    %24 = vector.shape_cast %23 : vector<8x64xf32> to vector<1x8x64xf32>
    %cst_22 = arith.constant 2.500000e-01 : f32
    %25 = vector.broadcast %cst_22 : f32 to vector<1x8x64xf32>
    %26 = arith.mulf %24, %25 : vector<1x8x64xf32>
    %27 = arith.mulf %1, %1 : vector<4x8x64xf32>
    %28 = arith.mulf %2, %2 : vector<4x8x64xf32>
    %29 = arith.addf %27, %28 : vector<4x8x64xf32>
    %cst_23 = arith.constant dense<0.000000e+00> : vector<8x64xf32>
    %30 = vector.multi_reduction <add>, %29, %cst_23 [0] : vector<4x8x64xf32> to vector<8x64xf32>
    %31 = vector.shape_cast %30 : vector<8x64xf32> to vector<1x8x64xf32>
    %cst_24 = arith.constant 2.500000e-01 : f32
    %32 = vector.broadcast %cst_24 : f32 to vector<1x8x64xf32>
    %33 = arith.mulf %31, %32 : vector<1x8x64xf32>
    %34 = vector.broadcast %0 : vector<1x8x1xf32> to vector<1x8x64xf32>
    %35 = arith.addf %33, %34 : vector<1x8x64xf32>
    %cst_25 = arith.constant 1.000000e+00 : f32
    %36 = vector.broadcast %cst_25 : f32 to vector<1x8x64xf32>
    %37 = arith.divf %36, %35 : vector<1x8x64xf32>
    %38 = arith.mulf %22, %37 : vector<1x8x64xf32>
    %39 = arith.mulf %26, %37 : vector<1x8x64xf32>
    %cst_26 = arith.constant 0.000000e+00 : f32
    %40 = vector.broadcast %cst_26 : f32 to vector<4x8x64xf32>
    %41 = arith.subf %40, %2 : vector<4x8x64xf32>
    %42 = vector.broadcast %38 : vector<1x8x64xf32> to vector<4x8x64xf32>
    %43 = arith.mulf %1, %42 : vector<4x8x64xf32>
    %44 = vector.broadcast %39 : vector<1x8x64xf32> to vector<4x8x64xf32>
    %45 = arith.mulf %41, %44 : vector<4x8x64xf32>
    %46 = arith.subf %43, %45 : vector<4x8x64xf32>
    %47 = vector.broadcast %39 : vector<1x8x64xf32> to vector<4x8x64xf32>
    %48 = arith.mulf %1, %47 : vector<4x8x64xf32>
    %49 = vector.broadcast %38 : vector<1x8x64xf32> to vector<4x8x64xf32>
    %50 = arith.mulf %41, %49 : vector<4x8x64xf32>
    %51 = arith.addf %48, %50 : vector<4x8x64xf32>
    %cst_27 = arith.constant 1.000000e+00 : f32
    %52 = vector.broadcast %cst_27 : f32 to vector<1x8x1xf32>
    %53 = arith.divf %52, %0 : vector<1x8x1xf32>
    %54 = arith.subf %7, %46 : vector<4x8x64xf32>
    %55 = vector.broadcast %53 : vector<1x8x1xf32> to vector<4x8x64xf32>
    %56 = arith.mulf %54, %55 : vector<4x8x64xf32>
    %c0_28 = arith.constant 0 : index
    %c0_29 = arith.constant 0 : index
    %c0_30 = arith.constant 0 : index
    %57 = vector.load %arg9[%c0_28, %c0_29, %c0_30] : memref<4x8x64xf32, #tpu.memory_space<vmem>>, vector<4x8x64xf32>
    tpu.vector_store %arg9[%c0_28, %c0_29, %c0_30], %56 {strides = array<i32>} : memref<4x8x64xf32, #tpu.memory_space<vmem>>, vector<4x8x64xf32>,
    %58 = arith.subf %12, %51 : vector<4x8x64xf32>
    %59 = vector.broadcast %53 : vector<1x8x1xf32> to vector<4x8x64xf32>
    %60 = arith.mulf %58, %59 : vector<4x8x64xf32>
    %c0_31 = arith.constant 0 : index
    %c0_32 = arith.constant 0 : index
    %c0_33 = arith.constant 0 : index
    %61 = vector.load %arg10[%c0_31, %c0_32, %c0_33] : memref<4x8x64xf32, #tpu.memory_space<vmem>>, vector<4x8x64xf32>
    tpu.vector_store %arg10[%c0_31, %c0_32, %c0_33], %60 {strides = array<i32>} : memref<4x8x64xf32, #tpu.memory_space<vmem>>, vector<4x8x64xf32>,
    return
  }
  func.func @transform_0(%arg0: i32, %arg1: i32) -> (i32, i32, i32) {
    %c0_i32 = arith.constant 0 : i32
    %c0_i32_0 = arith.constant 0 : i32
    %c0_i32_1 = arith.constant 0 : i32
    return %c0_i32, %arg0, %c0_i32_0 : i32, i32, i32
  }
  func.func @transform_1(%arg0: i32, %arg1: i32) -> (i32, i32, i32) {
    %c0_i32 = arith.constant 0 : i32
    %c0_i32_0 = arith.constant 0 : i32
    return %c0_i32, %arg0, %arg1 : i32, i32, i32
  }
  func.func @transform_2(%arg0: i32, %arg1: i32) -> (i32, i32, i32) {
    %c0_i32 = arith.constant 0 : i32
    %c0_i32_0 = arith.constant 0 : i32
    return %c0_i32, %arg0, %arg1 : i32, i32, i32
  }
  func.func @transform_3(%arg0: i32, %arg1: i32) -> (i32, i32, i32) {
    %c0_i32 = arith.constant 0 : i32
    %c0_i32_0 = arith.constant 0 : i32
    return %c0_i32, %arg0, %arg1 : i32, i32, i32
  }
  func.func @transform_4(%arg0: i32, %arg1: i32) -> (i32, i32, i32) {
    %c0_i32 = arith.constant 0 : i32
    %c0_i32_0 = arith.constant 0 : i32
    return %c0_i32, %arg0, %arg1 : i32, i32, i32
  }
  func.func @transform_5(%arg0: i32, %arg1: i32) -> (i32, i32, i32) {
    %c0_i32 = arith.constant 0 : i32
    %c0_i32_0 = arith.constant 0 : i32
    return %c0_i32, %arg0, %arg1 : i32, i32, i32
  }
  func.func @transform_6(%arg0: i32, %arg1: i32) -> (i32, i32, i32) {
    %c0_i32 = arith.constant 0 : i32
    %c0_i32_0 = arith.constant 0 : i32
    return %c0_i32, %arg0, %arg1 : i32, i32, i32
  }
  func.func @transform_7(%arg0: i32, %arg1: i32) -> (i32, i32, i32) {
    %c0_i32 = arith.constant 0 : i32
    %c0_i32_0 = arith.constant 0 : i32
    return %c0_i32, %arg0, %arg1 : i32, i32, i32
  }
  func.func @transform_8(%arg0: i32, %arg1: i32) -> (i32, i32, i32) {
    %c0_i32 = arith.constant 0 : i32
    %c0_i32_0 = arith.constant 0 : i32
    return %c0_i32, %arg0, %arg1 : i32, i32, i32
  }
}

</mosaic_0001>

<llo_original>
// kernel: tpu_custom_call.1
$region0: #{tpu_custom_call.1}
  #allocation0 [shape = 'u32[]', space=smem, size = 0x4, offset = 0x4, fixed_abs, tag = 'smem constant byte address 0x4 - core index']
  #allocation1 [shape = 'u32[144,128]{1,0:T(1,128)}', space=vmem, size = 0x12000, scoped, tag = 'internal scratch']
  %s0 = inlined_call_operand.vmem [shape: f32[1,8,1], index: 0, kind: input, shape index: {}]
  %s1 = inlined_call_operand.hbm [shape: f32[4,8,64], index: 1, kind: input, shape index: {}]
  %s2 = inlined_call_operand.hbm [shape: f32[4,8,64], index: 2, kind: input, shape index: {}]
  %s3 = inlined_call_operand.hbm [shape: f32[4,8,64], index: 3, kind: input, shape index: {}]
  %s4 = inlined_call_operand.hbm [shape: f32[4,8,64], index: 4, kind: input, shape index: {}]
  %s5 = inlined_call_operand.hbm [shape: f32[4,8,64], index: 5, kind: input, shape index: {}]
  %s6 = inlined_call_operand.hbm [shape: f32[4,8,64], index: 6, kind: input, shape index: {}]
  %s7 = inlined_call_operand.hbm [shape: f32[4,8,64], index: 7, kind: output, shape index: {0}]
  %s8 = inlined_call_operand.hbm [shape: f32[4,8,64], index: 8, kind: output, shape index: {1}]
  %9 = xla_tuple %s7, %s8
  %s10 = sld [smem:[#allocation0]]
  $region70: #{tpu_custom_call.1} parent=0
    _
  %s12 = ssub.s32 1, %s10
  %s13 = scalar_select 0, %s12, %s10
  $region1: #{tpu_custom_call.1} parent=0
    #allocation2 [shape = 'u8[16384]{0}', space=vmem, size = 0x4000, scoped, tag = 'input window, operand 1, single buffered']
    #allocation3 [shape = 's32[1]{0}', space=sflag, size = 0x4, scoped, tag = 'scoped memory for tpu_custom_call.1']
    #allocation4 [shape = 's32[1]{0}', space=sflag, size = 0x4, scoped, tag = 'scoped memory for tpu_custom_call.1']
    #allocation5 [shape = 'u8[16384]{0}', space=vmem, size = 0x4000, scoped, tag = 'input window, operand 2, single buffered']
    #allocation6 [shape = 's32[1]{0}', space=sflag, size = 0x4, scoped, tag = 'scoped memory for tpu_custom_call.1']
    #allocation7 [shape = 'u8[16384]{0}', space=vmem, size = 0x4000, scoped, tag = 'input window, operand 3, single buffered']
    #allocation8 [shape = 'u8[16384]{0}', space=vmem, size = 0x4000, scoped, tag = 'input window, operand 4, single buffered']
    #allocation9 [shape = 's32[1]{0}', space=sflag, size = 0x4, scoped, tag = 'scoped memory for tpu_custom_call.1']
    #allocation10 [shape = 'u8[16384]{0}', space=vmem, size = 0x4000, scoped, tag = 'input window, operand 5, single buffered']
    #allocation11 [shape = 'u8[16384]{0}', space=vmem, size = 0x4000, scoped, tag = 'input window, operand 6, single buffered']
    #allocation12 [shape = 's32[1]{0}', space=sflag, size = 0x4, scoped, tag = 'scoped memory for tpu_custom_call.1']
    #allocation13 [shape = 'u8[16384]{0}', space=vmem, size = 0x4000, scoped, tag = 'output window, operand 0, single buffered']
    #allocation14 [shape = 'u8[16384]{0}', space=vmem, size = 0x4000, scoped, tag = 'output window, operand 1, single buffered']
    #allocation15 [shape = 's32[1]{0}', space=sflag, size = 0x4, scoped, tag = 'scoped memory for tpu_custom_call.1']
    %14 = vsyncpa [#allocation3], 0
    %15 = vsyncpa [#allocation6], 0
    %16 = vsyncpa [#allocation9], 0
    %17 = vsyncpa [#allocation12], 0
    %18 = vsyncpa [#allocation4], 0
    %19 = vsyncpa [#allocation15], 0
    // Predicated region
    $region2: #{tpu_custom_call.1} parent=1 // pred_check
      _
    $region3: #{tpu_custom_call.1} parent=1 // pred_check_branch
      %21 = sbr.rel (0) target = $region5
    $region4: #{tpu_custom_call.1} parent=1 // pred_region
      _
    $region5: #{tpu_custom_call.1} parent=1 // pred_fallthru
      _
    // Predicated region
    $region6: #{tpu_custom_call.1} parent=1 // pred_check
      _
    $region7: #{tpu_custom_call.1} parent=1 // pred_check_branch
      %23 = sbr.rel (0) target = $region9
    $region8: #{tpu_custom_call.1} parent=1 // pred_region
      %s25 = ssub.s32 512, 512
      %26 = vsyncadd [#allocation3], %s25
      %s27 = sshll.u32 [#allocation2], 4
      %s28 = int_to_ptr.vmem [resolvable:$true] %s27
      %33 = dma.hbm_to_vmem [thread:$0]  %s1, 512, %s28, [#allocation3], 128, 128, 8
    $region9: #{tpu_custom_call.1} parent=1 // pred_fallthru
      _
    // Predicated region
    $region10: #{tpu_custom_call.1} parent=1 // pred_check
      _
    $region11: #{tpu_custom_call.1} parent=1 // pred_check_branch
      %35 = sbr.rel (0) target = $region13
    $region12: #{tpu_custom_call.1} parent=1 // pred_region
      %s37 = ssub.s32 512, 512
      %38 = vsyncadd [#allocation6], %s37
      %s39 = sshll.u32 [#allocation5], 4
      %s40 = int_to_ptr.vmem [resolvable:$true] %s39
      %45 = dma.hbm_to_vmem [thread:$0]  %s2, 512, %s40, [#allocation6], 128, 128, 8
    $region13: #{tpu_custom_call.1} parent=1 // pred_fallthru
      _
    // Predicated region
    $region14: #{tpu_custom_call.1} parent=1 // pred_check
      _
    $region15: #{tpu_custom_call.1} parent=1 // pred_check_branch
      %47 = sbr.rel (0) target = $region17
    $region16: #{tpu_custom_call.1} parent=1 // pred_region
      %s49 = ssub.s32 512, 512
      %50 = vsyncadd [#allocation6], %s49
      %s51 = sshll.u32 [#allocation7], 4
      %s52 = int_to_ptr.vmem [resolvable:$true] %s51
      %57 = dma.hbm_to_vmem [thread:$0]  %s3, 512, %s52, [#allocation6], 128, 128, 8
    $region17: #{tpu_custom_call.1} parent=1 // pred_fallthru
      _
    // Predicated region
    $region18: #{tpu_custom_call.1} parent=1 // pred_check
      _
    $region19: #{tpu_custom_call.1} parent=1 // pred_check_branch
      %59 = sbr.rel (0) target = $region21
    $region20: #{tpu_custom_call.1} parent=1 // pred_region
      %s61 = ssub.s32 512, 512
      %62 = vsyncadd [#allocation9], %s61
      %s63 = sshll.u32 [#allocation8], 4
      %s64 = int_to_ptr.vmem [resolvable:$true] %s63
      %69 = dma.hbm_to_vmem [thread:$0]  %s4, 512, %s64, [#allocation9], 128, 128, 8
    $region21: #{tpu_custom_call.1} parent=1 // pred_fallthru
      _
    // Predicated region
    $region22: #{tpu_custom_call.1} parent=1 // pred_check
      _
    $region23: #{tpu_custom_call.1} parent=1 // pred_check_branch
      %71 = sbr.rel (0) target = $region25
    $region24: #{tpu_custom_call.1} parent=1 // pred_region
      %s73 = ssub.s32 512, 512
      %74 = vsyncadd [#allocation9], %s73
      %s75 = sshll.u32 [#allocation10], 4
      %s76 = int_to_ptr.vmem [resolvable:$true] %s75
      %81 = dma.hbm_to_vmem [thread:$0]  %s5, 512, %s76, [#allocation9], 128, 128, 8
    $region25: #{tpu_custom_call.1} parent=1 // pred_fallthru
      _
    // Predicated region
    $region26: #{tpu_custom_call.1} parent=1 // pred_check
      _
    $region27: #{tpu_custom_call.1} parent=1 // pred_check_branch
      %83 = sbr.rel (0) target = $region29
    $region28: #{tpu_custom_call.1} parent=1 // pred_region
      %s85 = ssub.s32 512, 512
      %86 = vsyncadd [#allocation12], %s85
      %s87 = sshll.u32 [#allocation11], 4
      %s88 = int_to_ptr.vmem [resolvable:$true] %s87
      %93 = dma.hbm_to_vmem [thread:$0]  %s6, 512, %s88, [#allocation12], 128, 128, 8
    $region29: #{tpu_custom_call.1} parent=1 // pred_fallthru
      _
    // Predicated region
    $region30: #{tpu_custom_call.1} parent=1 // pred_check
      _
    $region31: #{tpu_custom_call.1} parent=1 // pred_check_branch
      %95 = sbr.rel (0) target = $region33
    $region32: #{tpu_custom_call.1} parent=1 // pred_region
      %96 = dma.done [#allocation3], 512
    $region33: #{tpu_custom_call.1} parent=1 // pred_fallthru
      _
    // Predicated region
    $region34: #{tpu_custom_call.1} parent=1 // pred_check
      _
    $region35: #{tpu_custom_call.1} parent=1 // pred_check_branch
      %98 = sbr.rel (0) target = $region37
    $region36: #{tpu_custom_call.1} parent=1 // pred_region
      %99 = dma.done [#allocation6], 512
    $region37: #{tpu_custom_call.1} parent=1 // pred_fallthru
      _
    // Predicated region
    $region38: #{tpu_custom_call.1} parent=1 // pred_check
      _
    $region39: #{tpu_custom_call.1} parent=1 // pred_check_branch
      %101 = sbr.rel (0) target = $region41
    $region40: #{tpu_custom_call.1} parent=1 // pred_region
      %102 = dma.done [#allocation6], 512
    $region41: #{tpu_custom_call.1} parent=1 // pred_fallthru
      _
    // Predicated region
    $region42: #{tpu_custom_call.1} parent=1 // pred_check
      _
    $region43: #{tpu_custom_call.1} parent=1 // pred_check_branch
      %104 = sbr.rel (0) target = $region45
    $region44: #{tpu_custom_call.1} parent=1 // pred_region
      %105 = dma.done [#allocation9], 512
    $region45: #{tpu_custom_call.1} parent=1 // pred_fallthru
      _
    // Predicated region
    $region46: #{tpu_custom_call.1} parent=1 // pred_check
      _
    $region47: #{tpu_custom_call.1} parent=1 // pred_check_branch
      %107 = sbr.rel (0) target = $region49
    $region48: #{tpu_custom_call.1} parent=1 // pred_region
      %108 = dma.done [#allocation9], 512
    $region49: #{tpu_custom_call.1} parent=1 // pred_fallthru
      _
    // Predicated region
    $region50: #{tpu_custom_call.1} parent=1 // pred_check
      _
    $region51: #{tpu_custom_call.1} parent=1 // pred_check_branch
      %110 = sbr.rel (0) target = $region53
    $region52: #{tpu_custom_call.1} parent=1 // pred_region
      %111 = dma.done [#allocation12], 512
    $region53: #{tpu_custom_call.1} parent=1 // pred_fallthru
      _
    %v112 = vld [vmem:[%s0] sm:$0xff]
    %v113 = vld [vmem:[#allocation10] sm:$0xff]
    %v114 = vld [vmem:[#allocation10 + $0x8] sm:$0xff]
    %v115 = vld [vmem:[#allocation10 + $0x10] sm:$0xff]
    %v116 = vld [vmem:[#allocation10 + $0x18] sm:$0xff]
    %v117 = vld [vmem:[#allocation11] sm:$0xff]
    %v118 = vld [vmem:[#allocation11 + $0x8] sm:$0xff]
    %v119 = vld [vmem:[#allocation11 + $0x10] sm:$0xff]
    %v120 = vld [vmem:[#allocation11 + $0x18] sm:$0xff]
    %v121 = vld [vmem:[#allocation7] sm:$0xff]
    %v122 = vld [vmem:[#allocation7 + $0x8] sm:$0xff]
    %v123 = vld [vmem:[#allocation7 + $0x10] sm:$0xff]
    %v124 = vld [vmem:[#allocation7 + $0x18] sm:$0xff]
    %v125 = vld [vmem:[#allocation2] sm:$0xff]
    %v126 = vld [vmem:[#allocation2 + $0x8] sm:$0xff]
    %v127 = vld [vmem:[#allocation2 + $0x10] sm:$0xff]
    %v128 = vld [vmem:[#allocation2 + $0x18] sm:$0xff]
    %130 = vset.pattern.permute.xlu0 0
    %131 = vperm.xlu0 %130, %v112
    %v132 = vpop.permute.xlu0 %131
    %v134 = vmul.f32 %v132, %v125
    %v135 = vmul.f32 %v132, %v126
    %v136 = vmul.f32 %v132, %v127
    %v137 = vmul.f32 %v132, %v128
    %v138 = vadd.f32 %v121, %v134
    %v139 = vadd.f32 %v122, %v135
    %v140 = vadd.f32 %v123, %v136
    %v141 = vadd.f32 %v124, %v137
    %v142 = vld [vmem:[#allocation8] sm:$0xff]
    %v143 = vld [vmem:[#allocation8 + $0x8] sm:$0xff]
    %v144 = vld [vmem:[#allocation8 + $0x10] sm:$0xff]
    %v145 = vld [vmem:[#allocation8 + $0x18] sm:$0xff]
    %v146 = vld [vmem:[#allocation5] sm:$0xff]
    %v147 = vld [vmem:[#allocation5 + $0x8] sm:$0xff]
    %v148 = vld [vmem:[#allocation5 + $0x10] sm:$0xff]
    %v149 = vld [vmem:[#allocation5 + $0x18] sm:$0xff]
    %v150 = vmul.f32 %v132, %v146
    %v151 = vmul.f32 %v132, %v147
    %v152 = vmul.f32 %v132, %v148
    %v153 = vmul.f32 %v132, %v149
    %v154 = vadd.f32 %v142, %v150
    %v155 = vadd.f32 %v143, %v151
    %v156 = vadd.f32 %v144, %v152
    %v157 = vadd.f32 %v145, %v153
    %v158 = vmul.f32 %v113, %v138
    %v159 = vmul.f32 %v114, %v139
    %v160 = vmul.f32 %v115, %v140
    %v161 = vmul.f32 %v116, %v141
    %v162 = vmul.f32 %v117, %v154
    %v163 = vmul.f32 %v118, %v155
    %v164 = vmul.f32 %v119, %v156
    %v165 = vmul.f32 %v120, %v157
    %v166 = vsub.f32 %v158, %v162
    %v167 = vsub.f32 %v159, %v163
    %v168 = vsub.f32 %v160, %v164
    %v169 = vsub.f32 %v161, %v165
    %v170 = vmul.f32 %v113, %v154
    %v171 = vmul.f32 %v114, %v155
    %v172 = vmul.f32 %v115, %v156
    %v173 = vmul.f32 %v116, %v157
    %v174 = vmul.f32 %v117, %v138
    %v175 = vmul.f32 %v118, %v139
    %v176 = vmul.f32 %v119, %v140
    %v177 = vmul.f32 %v120, %v141
    %v178 = vadd.f32 %v170, %v174
    %v179 = vadd.f32 %v171, %v175
    %v180 = vadd.f32 %v172, %v176
    %v181 = vadd.f32 %v173, %v177
    %vm182 = vcmask 523264
    %v183 = vsel %vm182, %v166, 0.0
    %v184 = vsel %vm182, %v167, 0.0
    %v185 = vadd.f32 %v183, %v184
    %v186 = vsel %vm182, %v168, 0.0
    %v187 = vadd.f32 %v185, %v186
    %v188 = vsel %vm182, %v169, 0.0
    %v189 = vadd.f32 %v187, %v188
    %v190 = vmul.f32 %v189, 0.25
    %v191 = vsel %vm182, %v178, 0.0
    %v192 = vsel %vm182, %v179, 0.0
    %v193 = vadd.f32 %v191, %v192
    %v194 = vsel %vm182, %v180, 0.0
    %v195 = vadd.f32 %v193, %v194
    %v196 = vsel %vm182, %v181, 0.0
    %v197 = vadd.f32 %v195, %v196
    %v198 = vmul.f32 %v197, 0.25
    %v199 = vmul.f32 %v113, %v113
    %v200 = vmul.f32 %v114, %v114
    %v201 = vmul.f32 %v115, %v115
    %v202 = vmul.f32 %v116, %v116
    %v203 = vmul.f32 %v117, %v117
    %v204 = vmul.f32 %v118, %v118
    %v205 = vmul.f32 %v119, %v119
    %v206 = vmul.f32 %v120, %v120
    %v207 = vadd.f32 %v199, %v203
    %v208 = vadd.f32 %v200, %v204
    %v209 = vadd.f32 %v201, %v205
    %v210 = vadd.f32 %v202, %v206
    %v211 = vsel %vm182, %v207, 0.0
    %v212 = vsel %vm182, %v208, 0.0
    %v213 = vadd.f32 %v211, %v212
    %v214 = vsel %vm182, %v209, 0.0
    %v215 = vadd.f32 %v213, %v214
    %v216 = vsel %vm182, %v210, 0.0
    %v217 = vadd.f32 %v215, %v216
    %v218 = vmul.f32 %v217, 0.25
    %v219 = vadd.f32 %v218, %v132
    %v220 = vrcp.pop %v219
    %v221 = vmul.f32 1.0, %v220
    %v222 = vmul.f32 %v190, %v221
    %v223 = vmul.f32 %v198, %v221
    %v224 = vsub.f32 0.0, %v117
    %v225 = vsub.f32 0.0, %v118
    %v226 = vsub.f32 0.0, %v119
    %v227 = vsub.f32 0.0, %v120
    %v228 = vmul.f32 %v113, %v222
    %v229 = vmul.f32 %v114, %v222
    %v230 = vmul.f32 %v115, %v222
    %v231 = vmul.f32 %v116, %v222
    %v232 = vmul.f32 %v224, %v223
    %v233 = vmul.f32 %v225, %v223
    %v234 = vmul.f32 %v226, %v223
    %v235 = vmul.f32 %v227, %v223
    %v236 = vsub.f32 %v228, %v232
    %v237 = vsub.f32 %v229, %v233
    %v238 = vsub.f32 %v230, %v234
    %v239 = vsub.f32 %v231, %v235
    %v240 = vmul.f32 %v113, %v223
    %v241 = vmul.f32 %v114, %v223
    %v242 = vmul.f32 %v115, %v223
    %v243 = vmul.f32 %v116, %v223
    %v244 = vmul.f32 %v224, %v222
    %v245 = vmul.f32 %v225, %v222
    %v246 = vmul.f32 %v226, %v222
    %v247 = vmul.f32 %v227, %v222
    %v248 = vadd.f32 %v240, %v244
    %v249 = vadd.f32 %v241, %v245
    %v250 = vadd.f32 %v242, %v246
    %v251 = vadd.f32 %v243, %v247
    %v252 = vrcp.pop %v112
    %v253 = vmul.f32 1.0, %v252
    %v254 = vsub.f32 %v138, %v236
    %v255 = vsub.f32 %v139, %v237
    %v256 = vsub.f32 %v140, %v238
    %v257 = vsub.f32 %v141, %v239
    %259 = vset.pattern.permute.xlu0 0
    %260 = vperm.xlu0 %259, %v253
    %v261 = vpop.permute.xlu0 %260
    %v263 = vmul.f32 %v254, %v261
    %v264 = vmul.f32 %v255, %v261
    %v265 = vmul.f32 %v256, %v261
    %v266 = vmul.f32 %v257, %v261
    %267 = vst.msk [vmem:[#allocation13] sm:$0xff] %vm182, %v263
    %268 = vst.msk [vmem:[#allocation13 + $0x8] sm:$0xff] %vm182, %v264
    %269 = vst.msk [vmem:[#allocation13 + $0x10] sm:$0xff] %vm182, %v265
    %270 = vst.msk [vmem:[#allocation13 + $0x18] sm:$0xff] %vm182, %v266
    %v271 = vsub.f32 %v154, %v248
    %v272 = vsub.f32 %v155, %v249
    %v273 = vsub.f32 %v156, %v250
    %v274 = vsub.f32 %v157, %v251
    %v275 = vmul.f32 %v271, %v261
    %v276 = vmul.f32 %v272, %v261
    %v277 = vmul.f32 %v273, %v261
    %v278 = vmul.f32 %v274, %v261
    %279 = vst.msk [vmem:[#allocation14] sm:$0xff] %vm182, %v275
    %280 = vst.msk [vmem:[#allocation14 + $0x8] sm:$0xff] %vm182, %v276
    %281 = vst.msk [vmem:[#allocation14 + $0x10] sm:$0xff] %vm182, %v277
    %282 = vst.msk [vmem:[#allocation14 + $0x18] sm:$0xff] %vm182, %v278
    // Predicated region
    $region54: #{tpu_custom_call.1} parent=1 // pred_check
      _
    $region55: #{tpu_custom_call.1} parent=1 // pred_check_branch
      %284 = sbr.rel (0) target = $region57
    $region56: #{tpu_custom_call.1} parent=1 // pred_region
      %s286 = ssub.s32 512, 512
      %287 = vsyncadd [#allocation4], %s286
      %s288 = sshll.u32 [#allocation13], 4
      %s289 = int_to_ptr.vmem [resolvable:$true] %s288
      %294 = dma.vmem_to_hbm [thread:$0]  %s289, 512, %s7, [#allocation4], 128, 128, 8
    $region57: #{tpu_custom_call.1} parent=1 // pred_fallthru
      _
    // Predicated region
    $region58: #{tpu_custom_call.1} parent=1 // pred_check
      _
    $region59: #{tpu_custom_call.1} parent=1 // pred_check_branch
      %296 = sbr.rel (0) target = $region61
    $region60: #{tpu_custom_call.1} parent=1 // pred_region
      %s298 = ssub.s32 512, 512
      %299 = vsyncadd [#allocation15], %s298
      %s300 = sshll.u32 [#allocation14], 4
      %s301 = int_to_ptr.vmem [resolvable:$true] %s300
      %306 = dma.vmem_to_hbm [thread:$0]  %s301, 512, %s8, [#allocation15], 128, 128, 8
    $region61: #{tpu_custom_call.1} parent=1 // pred_fallthru
      _
    // Predicated region
    $region62: #{tpu_custom_call.1} parent=1 // pred_check
      _
    $region63: #{tpu_custom_call.1} parent=1 // pred_check_branch
      %308 = sbr.rel (0) target = $region65
    $region64: #{tpu_custom_call.1} parent=1 // pred_region
      %309 = dma.done [#allocation4], 512
    $region65: #{tpu_custom_call.1} parent=1 // pred_fallthru
      _
    // Predicated region
    $region66: #{tpu_custom_call.1} parent=1 // pred_check
      _
    $region67: #{tpu_custom_call.1} parent=1 // pred_check_branch
      %311 = sbr.rel (0) target = $region69
    $region68: #{tpu_custom_call.1} parent=1 // pred_region
      %312 = dma.done [#allocation15], 512
    $region69: #{tpu_custom_call.1} parent=1 // pred_fallthru
      _
    %313 = vsyncpa [#allocation3], 1
    %314 = vsyncpa [#allocation6], 1
    %315 = vsyncpa [#allocation9], 1
    %316 = vsyncpa [#allocation12], 1
    %317 = vsyncpa [#allocation4], 1
    %318 = vsyncpa [#allocation15], 1

</llo_original>
